<compile_context>
chip_gen: v6e
topology: v6e:2x2x1
jax: 0.10.0
libtpu: 0.0.40
codegen_flags: <defaults>
</compile_context>

<pallas_src>
import jax
import jax.numpy as jnp
from jax.experimental import pallas as pl
from jax.experimental.pallas import tpu as pltpu


def _mlp_kernel(x_ref, w1t_ref, b1_ref, w2_ref, b2_ref, o_ref):
    """One batch tile of the 2-layer MLP.

    x_ref  : (D, TB)   batch tile, batch on the lane axis
    w1t_ref: (N_h, D)  fc weight (pre-transposed), VMEM-resident across grid
    b1_ref : (N_h, 1)  fc bias as a column (broadcasts over lanes)
    w2_ref : (N_h, 1)  output weight as a column
    b2_ref : (1, 1)    output bias, SMEM scalar
    o_ref  : (1, TB)   lane-dense scores
    """
    # Layer 1 on the MXU: (N_h, D) @ (D, TB) -> (N_h, TB), f32 accumulation.
    h = jnp.dot(w1t_ref[...], x_ref[...], preferred_element_type=jnp.float32)
    h = jnp.maximum(h + b1_ref[...], 0.0)                     # bias + relu (VPU)
    # Layer 2 is only 20 MACs per column: do it on the VPU/XLU (elementwise
    # scale + sublane reduce) instead of a tiny MXU GEMV.
    score = jnp.sum(h * w2_ref[...], axis=0, keepdims=True)   # (1, TB)
    o_ref[...] = score + b2_ref[0, 0]


def meta_classifier_forward_batched(preds, w1, b1, w2, b2, *, batch_tile=128):
    """Scores a batch of flattened prediction vectors.

    preds: (B, D); w1: (D, N_h); b1: (N_h,); w2: (N_h, 1); b2: (1,)
    Returns (B,) scores — one MetaClassifier.forward per row.
    """
    B, D = preds.shape
    N_h = w1.shape[1]
    TB = batch_tile
    B_pad = pl.cdiv(B, TB) * TB

    # Batch along the lane axis; zero-pad to a full lane tile.
    x = jnp.zeros((D, B_pad), jnp.float32).at[:, :B].set(preds.T.astype(jnp.float32))
    w1t = jnp.asarray(w1, jnp.float32).T                      # (N_h, D)
    b1c = jnp.asarray(b1, jnp.float32).reshape(N_h, 1)
    w2c = jnp.asarray(w2, jnp.float32).reshape(N_h, 1)
    b2s = jnp.asarray(b2, jnp.float32).reshape(1, 1)

    cost = pl.CostEstimate(
        flops=2 * B_pad * N_h * (D + 1),
        transcendentals=0,
        bytes_accessed=4 * (x.size + w1t.size + b1c.size + w2c.size + b2s.size + B_pad),
    )
    out = pl.pallas_call(
        _mlp_kernel,
        out_shape=jax.ShapeDtypeStruct((1, B_pad), jnp.float32),
        grid=(B_pad // TB,),
        in_specs=[
            pl.BlockSpec((D, TB), lambda i: (0, i)),            # batch tile
            pl.BlockSpec((N_h, D), lambda i: (0, 0)),           # weights stay VMEM-resident
            pl.BlockSpec((N_h, 1), lambda i: (0, 0)),
            pl.BlockSpec((N_h, 1), lambda i: (0, 0)),
            pl.BlockSpec(memory_space=pltpu.MemorySpace.SMEM),  # b2 scalar
        ],
        out_specs=pl.BlockSpec((1, TB), lambda i: (0, i)),      # lane-dense scores
        compiler_params=pltpu.CompilerParams(
            dimension_semantics=("parallel",)),                 # both TCs on v7x
        cost_estimate=cost,
    )(x, w1t, b1c, w2c, b2s)
    return out[0, :B]


def meta_classifier_forward(pred, w1, b1, w2, b2):
    """Exact MetaClassifier.forward semantics: one pred -> score of shape (1,).

    (For a genuinely single 80-element vector the pallas_call boundary is pure
    overhead vs. plain jnp; the batched entry point above is where the kernel
    earns its keep.)
    """
    D = w1.shape[0]
    return meta_classifier_forward_batched(pred.reshape(1, D), w1, b1, w2, b2)


if __name__ == "__main__":
    # Shapes consistent with the module.
    N_in, class_num, N_tokens = 10, 8, 1
    N_h = 20
    D = N_in * class_num * N_tokens
    B = 256  # batched path: two 128-wide grid steps

    key = jax.random.PRNGKey(0)
    k_pred, k_batch, k_w1, k_b1, k_w2, k_b2 = jax.random.split(key, 6)

    # Deterministic synthetic parameters mimicking nn.Linear init ranges.
    w1 = jax.random.uniform(k_w1, (D, N_h), jnp.float32, -1.0, 1.0) / jnp.sqrt(D)
    b1 = jax.random.uniform(k_b1, (N_h,), jnp.float32, -1.0, 1.0) / jnp.sqrt(D)
    w2 = jax.random.uniform(k_w2, (N_h, 1), jnp.float32, -1.0, 1.0) / jnp.sqrt(N_h)
    b2 = jax.random.uniform(k_b2, (1,), jnp.float32, -1.0, 1.0) / jnp.sqrt(N_h)

    def reference(flat_preds):
        h = jnp.maximum(
            jnp.dot(flat_preds, w1, precision=jax.lax.Precision.HIGHEST) + b1, 0.0)
        return (jnp.dot(h, w2, precision=jax.lax.Precision.HIGHEST) + b2).reshape(-1)

    # 1) Module-faithful single-prediction forward.
    pred = jax.random.normal(k_pred, (N_in, class_num, N_tokens), jnp.float32)
    score = meta_classifier_forward(pred, w1, b1, w2, b2)
    jax.block_until_ready(score)
    assert score.shape == (1,)
    assert jnp.allclose(score, reference(pred.reshape(1, D)), atol=1e-4, rtol=1e-4)

    # 2) Batched path (the perf-relevant one).
    preds = jax.random.normal(k_batch, (B, N_in, class_num, N_tokens), jnp.float32)
    scores = meta_classifier_forward_batched(preds.reshape(B, D), w1, b1, w2, b2)
    jax.block_until_ready(scores)
    assert scores.shape == (B,)
    assert jnp.allclose(scores, reference(preds.reshape(B, D)), atol=1e-4, rtol=1e-4)

    print("KERNEL_OK")
</pallas_src>

<mosaic_0001>
module attributes {stable_mosaic.version = 11 : i64} {
  func.func @_mlp_kernel(%arg0: i32, %arg1: memref<80x128xf32, #tpu.memory_space<vmem>>, %arg2: memref<20x80xf32, #tpu.memory_space<vmem>>, %arg3: memref<20x1xf32, #tpu.memory_space<vmem>>, %arg4: memref<20x1xf32, #tpu.memory_space<vmem>>, %arg5: memref<1x1xf32, #tpu.memory_space<smem>>, %arg6: memref<1x128xf32, #tpu.memory_space<vmem>>) attributes {dimension_semantics = [#tpu.dimension_semantics<parallel>], iteration_bounds = array<i64: 1>, scalar_prefetch = 0 : i64, scratch_operands = 0 : i64, tpu.core_type = #tpu.core_type<tc>, window_params = [{transform_indices = @transform_0, window_bounds = array<i64: 80, 128>}, {pipeline_mode = #tpu.pipeline_mode<synchronous>, transform_indices = @transform_1, window_bounds = array<i64: 20, 80>}, {pipeline_mode = #tpu.pipeline_mode<synchronous>, transform_indices = @transform_2, window_bounds = array<i64: 20, 1>}, {pipeline_mode = #tpu.pipeline_mode<synchronous>, transform_indices = @transform_3, window_bounds = array<i64: 20, 1>}, {transform_indices = @transform_4, window_bounds = array<i64: 1, 1>}, {transform_indices = @transform_5, window_bounds = array<i64: 1, 128>}]} {
    %c0 = arith.constant 0 : index
    %c0_0 = arith.constant 0 : index
    %0 = vector.load %arg2[%c0, %c0_0] : memref<20x80xf32, #tpu.memory_space<vmem>>, vector<20x80xf32>
    %c0_1 = arith.constant 0 : index
    %c0_2 = arith.constant 0 : index
    %1 = vector.load %arg1[%c0_1, %c0_2] : memref<80x128xf32, #tpu.memory_space<vmem>>, vector<80x128xf32>
    %cst = arith.constant dense<0.000000e+00> : vector<20x128xf32>
    %2 = tpu.matmul %0, %1, %cst {dimension_numbers = #tpu.dot_dimension_numbers<[1], [0], [0], [1], [0, 0, 1, 1], [], []>} : vector<20x80xf32>, vector<80x128xf32>, vector<20x128xf32> -> vector<20x128xf32>
    %c0_3 = arith.constant 0 : index
    %c0_4 = arith.constant 0 : index
    %3 = vector.load %arg3[%c0_3, %c0_4] : memref<20x1xf32, #tpu.memory_space<vmem>>, vector<20x1xf32>
    %4 = vector.broadcast %3 : vector<20x1xf32> to vector<20x128xf32>
    %5 = arith.addf %2, %4 : vector<20x128xf32>
    %cst_5 = arith.constant 0.000000e+00 : f32
    %6 = vector.broadcast %cst_5 : f32 to vector<20x128xf32>
    %7 = arith.maximumf %5, %6 : vector<20x128xf32>
    %c0_6 = arith.constant 0 : index
    %c0_7 = arith.constant 0 : index
    %8 = vector.load %arg4[%c0_6, %c0_7] : memref<20x1xf32, #tpu.memory_space<vmem>>, vector<20x1xf32>
    %9 = vector.broadcast %8 : vector<20x1xf32> to vector<20x128xf32>
    %10 = arith.mulf %7, %9 : vector<20x128xf32>
    %cst_8 = arith.constant dense<0.000000e+00> : vector<128xf32>
    %11 = vector.multi_reduction <add>, %10, %cst_8 [0] : vector<20x128xf32> to vector<128xf32>
    %12 = vector.shape_cast %11 : vector<128xf32> to vector<1x128xf32>
    %c0_9 = arith.constant 0 : index
    %c0_10 = arith.constant 0 : index
    %13 = memref.load %arg5[%c0_9, %c0_10] : memref<1x1xf32, #tpu.memory_space<smem>>
    %14 = vector.broadcast %13 : f32 to vector<1x128xf32>
    %15 = arith.addf %12, %14 : vector<1x128xf32>
    %c0_11 = arith.constant 0 : index
    %c0_12 = arith.constant 0 : index
    %16 = vector.load %arg6[%c0_11, %c0_12] : memref<1x128xf32, #tpu.memory_space<vmem>>, vector<1x128xf32>
    tpu.vector_store %arg6[%c0_11, %c0_12], %15 {strides = array<i32>} : memref<1x128xf32, #tpu.memory_space<vmem>>, vector<1x128xf32>,
    return
  }
  func.func @transform_0(%arg0: i32) -> (i32, i32) {
    %c0_i32 = arith.constant 0 : i32
    %c0_i32_0 = arith.constant 0 : i32
    return %c0_i32, %arg0 : i32, i32
  }
  func.func @transform_1(%arg0: i32) -> (i32, i32) {
    %c0_i32 = arith.constant 0 : i32
    %c0_i32_0 = arith.constant 0 : i32
    %c0_i32_1 = arith.constant 0 : i32
    return %c0_i32, %c0_i32_0 : i32, i32
  }
  func.func @transform_2(%arg0: i32) -> (i32, i32) {
    %c0_i32 = arith.constant 0 : i32
    %c0_i32_0 = arith.constant 0 : i32
    %c0_i32_1 = arith.constant 0 : i32
    return %c0_i32, %c0_i32_0 : i32, i32
  }
  func.func @transform_3(%arg0: i32) -> (i32, i32) {
    %c0_i32 = arith.constant 0 : i32
    %c0_i32_0 = arith.constant 0 : i32
    %c0_i32_1 = arith.constant 0 : i32
    return %c0_i32, %c0_i32_0 : i32, i32
  }
  func.func @transform_4(%arg0: i32) -> (i32, i32) {
    %c0_i32 = arith.constant 0 : i32
    %c0_i32_0 = arith.constant 0 : i32
    %c0_i32_1 = arith.constant 0 : i32
    return %c0_i32, %c0_i32_0 : i32, i32
  }
  func.func @transform_5(%arg0: i32) -> (i32, i32) {
    %c0_i32 = arith.constant 0 : i32
    %c0_i32_0 = arith.constant 0 : i32
    return %c0_i32, %arg0 : i32, i32
  }
}

</mosaic_0001>

<llo_original>
// kernel: tpu_custom_call.1
$region0: #{tpu_custom_call.1}
  #allocation0 [shape = 'u32[]', space=smem, size = 0x4, offset = 0x4, fixed_abs, tag = 'smem constant byte address 0x4 - core index']
  #allocation1 [shape = 'u32[144,128]{1,0:T(1,128)}', space=vmem, size = 0x12000, scoped, tag = 'internal scratch']
  #allocation2 [shape = 'f32[1,1]{1,0:T(1,128)S(6)}', space=smem, size = 0x200, scoped, tag = 'scoped memory for tpu_custom_call.1']
  %s0 = inlined_call_operand.hbm [shape: f32[80,128], index: 0, kind: input, shape index: {}]
  %s1 = inlined_call_operand.vmem [shape: f32[20,80], index: 1, kind: input, shape index: {}]
  %s2 = inlined_call_operand.vmem [shape: f32[20,1], index: 2, kind: input, shape index: {}]
  %s3 = inlined_call_operand.vmem [shape: f32[20,1], index: 3, kind: input, shape index: {}]
  %s4 = inlined_call_operand.<no memory space> [shape: f32[1,1], index: 4, kind: input, shape index: {}]
  %s5 = inlined_call_operand.hbm [shape: f32[1,128], index: 5, kind: output, shape index: {}]
  %s6 = sld [smem:[#allocation0]]
  $region34: #{tpu_custom_call.1} parent=0
    _
  %s8 = ssub.s32 1, %s6
  %s9 = scalar_select 0, %s8, %s6
  %10 = sst [smem:[#allocation2]] %s4
  $region1: #{tpu_custom_call.1} parent=0
    #allocation3 [shape = 'u8[40960]{0}', space=vmem, size = 0xa000, scoped, tag = 'input window, operand 0, single buffered']
    #allocation4 [shape = 's32[1]{0}', space=sflag, size = 0x4, scoped, tag = 'scoped memory for tpu_custom_call.1']
    #allocation5 [shape = 's32[1]{0}', space=sflag, size = 0x4, scoped, tag = 'scoped memory for tpu_custom_call.1']
    #allocation6 [shape = 'u8[512]{0}', space=vmem, size = 0x400, scoped, tag = 'output window, operand 0, single buffered']
    %11 = vsyncpa [#allocation4], 0
    %12 = vsyncpa [#allocation5], 0
    // Predicated region
    $region2: #{tpu_custom_call.1} parent=1 // pred_check
      _
    $region3: #{tpu_custom_call.1} parent=1 // pred_check_branch
      %14 = sbr.rel (0) target = $region5
    $region4: #{tpu_custom_call.1} parent=1 // pred_region
      %s16 = ssub.s32 1280, 1280
      %17 = vsyncadd [#allocation4], %s16
      %s18 = sshll.u32 [#allocation3], 4
      %s19 = int_to_ptr.vmem [resolvable:$true] %s18
      %24 = dma.hbm_to_vmem [thread:$0]  %s0, 1280, %s19, [#allocation4], 128, 128, 8
    $region5: #{tpu_custom_call.1} parent=1 // pred_fallthru
      _
    // Predicated region
    $region6: #{tpu_custom_call.1} parent=1 // pred_check
      _
    $region7: #{tpu_custom_call.1} parent=1 // pred_check_branch
      %26 = sbr.rel (0) target = $region9
    $region8: #{tpu_custom_call.1} parent=1 // pred_region
      _
    $region9: #{tpu_custom_call.1} parent=1 // pred_fallthru
      _
    // Predicated region
    $region10: #{tpu_custom_call.1} parent=1 // pred_check
      _
    $region11: #{tpu_custom_call.1} parent=1 // pred_check_branch
      %28 = sbr.rel (0) target = $region13
    $region12: #{tpu_custom_call.1} parent=1 // pred_region
      _
    $region13: #{tpu_custom_call.1} parent=1 // pred_fallthru
      _
    // Predicated region
    $region14: #{tpu_custom_call.1} parent=1 // pred_check
      _
    $region15: #{tpu_custom_call.1} parent=1 // pred_check_branch
      %30 = sbr.rel (0) target = $region17
    $region16: #{tpu_custom_call.1} parent=1 // pred_region
      _
    $region17: #{tpu_custom_call.1} parent=1 // pred_fallthru
      _
    // Predicated region
    $region18: #{tpu_custom_call.1} parent=1 // pred_check
      _
    $region19: #{tpu_custom_call.1} parent=1 // pred_check_branch
      %32 = sbr.rel (0) target = $region21
    $region20: #{tpu_custom_call.1} parent=1 // pred_region
      _
    $region21: #{tpu_custom_call.1} parent=1 // pred_fallthru
      _
    // Predicated region
    $region22: #{tpu_custom_call.1} parent=1 // pred_check
      _
    $region23: #{tpu_custom_call.1} parent=1 // pred_check_branch
      %34 = sbr.rel (0) target = $region25
    $region24: #{tpu_custom_call.1} parent=1 // pred_region
      %35 = dma.done [#allocation4], 1280
    $region25: #{tpu_custom_call.1} parent=1 // pred_fallthru
      _
    %v36 = vld [vmem:[%s1] sm:$0xff]
    %v37 = vld [vmem:[%s1 + $0x8] sm:$0xff]
    %v38 = vld [vmem:[%s1 + $0x10] sm:$0xf]
    %v39 = vld [vmem:[#allocation3] sm:$0xff]
    %v40 = vld [vmem:[#allocation3 + $0x8] sm:$0xff]
    %v41 = vld [vmem:[#allocation3 + $0x10] sm:$0xff]
    %v42 = vld [vmem:[#allocation3 + $0x18] sm:$0xff]
    %v43 = vld [vmem:[#allocation3 + $0x20] sm:$0xff]
    %v44 = vld [vmem:[#allocation3 + $0x28] sm:$0xff]
    %v45 = vld [vmem:[#allocation3 + $0x30] sm:$0xff]
    %v46 = vld [vmem:[#allocation3 + $0x38] sm:$0xff]
    %v47 = vld [vmem:[#allocation3 + $0x40] sm:$0xff]
    %v48 = vld [vmem:[#allocation3 + $0x48] sm:$0xff]
    %v49 = vld [vmem:[%s2] sm:$0xff]
    %v50 = vld [vmem:[%s2 + $0x8] sm:$0xff]
    %v51 = vld [vmem:[%s2 + $0x10] sm:$0xf]
    %53 = vset.pattern.permute.xlu0 0
    %54 = vperm.xlu0 %53, %v49
    %v55 = vpop.permute.xlu0 %54
    %58 = vset.pattern.permute.xlu0 0
    %59 = vperm.xlu0 %58, %v50
    %v60 = vpop.permute.xlu0 %59
    %63 = vset.pattern.permute.xlu0 0
    %64 = vperm.xlu0 %63, %v51
    %v65 = vpop.permute.xlu0 %64
    %vm67 = vcmask 654336
    %v69 = vsel %vm67, %v36, 0
    %v72 = vsel %vm67, %v37, 0
    %v75 = vsel %vm67, %v38, 0
    %77 = vmatprep.subr.mxu0 0.0
    %78 = vmatpush1.msra.mxu0 0.0
    %79 = vmatprep.subr.mxu0 0.0
    %80 = vmatpush1.msra.mxu0 0.0
    %81 = vmatprep.subr.mxu0 0.0
    %82 = vmatpush1.msra.mxu0 0.0
    %83 = vmatprep.subr.mxu0 0.0
    %84 = vmatpush1.msra.mxu0 0.0
    %85 = vmatprep.subr.mxu0 0.0
    %86 = vmatpush1.msra.mxu0 0.0
    %87 = vmatprep.subr.mxu0 0.0
    %88 = vmatpush1.msra.mxu0 0.0
    %89 = vmatprep.subr.mxu0 0.0
    %90 = vmatpush1.msra.mxu0 %v48
    %91 = vmatprep.subr.mxu0 0.0
    %92 = vmatpush1.msra.mxu0 %v47
    %93 = vmatprep.subr.mxu0 0.0
    %94 = vmatpush1.msra.mxu0 %v46
    %95 = vmatprep.subr.mxu0 0.0
    %96 = vmatpush1.msra.mxu0 %v45
    %97 = vmatprep.subr.mxu0 0.0
    %98 = vmatpush1.msra.mxu0 %v44
    %99 = vmatprep.subr.mxu0 0.0
    %100 = vmatpush1.msra.mxu0 %v43
    %101 = vmatprep.subr.mxu0 0.0
    %102 = vmatpush1.msra.mxu0 %v42
    %103 = vmatprep.subr.mxu0 0.0
    %104 = vmatpush1.msra.mxu0 %v41
    %105 = vmatprep.subr.mxu0 0.0
    %106 = vmatpush1.msra.mxu0 %v40
    %107 = vmatprep.subr.mxu0 0.0
    %108 = vmatpush1.msra.mxu0 %v39
    %109 = vmatprep.subr.mxu0 0.0
    %110 = vmatpush2.msra.mxu0 0.0
    %111 = vmatprep.subr.mxu0 0.0
    %112 = vmatpush2.msra.mxu0 0.0
    %113 = vmatprep.subr.mxu0 0.0
    %114 = vmatpush2.msra.mxu0 0.0
    %115 = vmatprep.subr.mxu0 0.0
    %116 = vmatpush2.msra.mxu0 0.0
    %117 = vmatprep.subr.mxu0 0.0
    %118 = vmatpush2.msra.mxu0 0.0
    %119 = vmatprep.subr.mxu0 0.0
    %120 = vmatpush2.msra.mxu0 0.0
    %121 = vmatprep.subr.mxu0 0.0
    %122 = vmatpush2.msra.mxu0 0.0
    %123 = vmatprep.subr.mxu0 0.0
    %124 = vmatpush2.msra.mxu0 0.0
    %125 = vmatprep.subr.mxu0 0.0
    %126 = vmatpush2.msra.mxu0 0.0
    %127 = vmatprep.subr.mxu0 0.0
    %128 = vmatpush2.msra.mxu0 0.0
    %129 = vmatprep.subr.mxu0 0.0
    %130 = vmatpush2.msra.mxu0 0.0
    %131 = vmatprep.subr.mxu0 0.0
    %132 = vmatpush2.msra.mxu0 0.0
    %133 = vmatprep.subr.mxu0 0.0
    %134 = vmatpush2.msra.mxu0 0.0
    %135 = vmatprep.subr.mxu0 0.0
    %136 = vmatpush2.msra.mxu0 0.0
    %137 = vmatprep.subr.mxu0 0.0
    %138 = vmatpush2.msra.mxu0 0.0
    %139 = vmatprep.subr.mxu0 0.0
    %140 = vmatpush2.msra.mxu0 0.0
    %141 = vmatprep.mubr.f32.mxu0 0.0
    %142 = vmatmul.mubr.f32.gmra.mxu0 %v69
    %v143 = vpop.f32.mrf.mxu0
    %v144 = vadd.f32 %v55, %v143
    %v145 = vpop.f32.mrf.mxu0
    %146 = vmatprep.mubr.f32.mxu0 0.0
    %147 = vmatmul.mubr.f32.gmra.mxu0 %v72
    %v148 = vpop.f32.mrf.mxu0
    %v149 = vadd.f32 %v60, %v148
    %v150 = vpop.f32.mrf.mxu0
    %151 = vmatprep.mubr.f32.mxu0 0.0
    %152 = vmatmul.mubr.f32.gmra.mxu0 %v75
    %v153 = vpop.f32.mrf.mxu0
    %v154 = vadd.f32 %v65, %v153
    %v155 = vpop.f32.mrf.mxu0
    %156 = vdwg.mxu0
    %v157 = vmax.f32 %v144, 0.0
    %v158 = vmax.f32 %v149, 0.0
    %v159 = vmax.f32 %v154, 0.0
    %v160 = vld [vmem:[%s3] sm:$0xff]
    %v161 = vld [vmem:[%s3 + $0x8] sm:$0xff]
    %v162 = vld [vmem:[%s3 + $0x10] sm:$0xf]
    %164 = vset.pattern.permute.xlu0 0
    %165 = vperm.xlu0 %164, %v160
    %v166 = vpop.permute.xlu0 %165
    %169 = vset.pattern.permute.xlu0 0
    %170 = vperm.xlu0 %169, %v161
    %v171 = vpop.permute.xlu0 %170
    %174 = vset.pattern.permute.xlu0 0
    %175 = vperm.xlu0 %174, %v162
    %v176 = vpop.permute.xlu0 %175
    %v178 = vmul.f32 %v157, %v166
    %v179 = vmul.f32 %v158, %v171
    %v180 = vmul.f32 %v159, %v176
    %v181 = vadd.f32 %v178, %v179
    %vm182 = vcmask 1043456
    %v183 = vsel %vm182, %v180, 0.0
    %v184 = vadd.f32 %v181, %v183
    %v185 = vrot.slane %v184, 4
    %v186 = vadd.f32 %v184, %v185
    %v187 = vrot.slane %v186, 2
    %v188 = vadd.f32 %v186, %v187
    %v189 = vrot.slane %v188, 1
    %v190 = vadd.f32 %v188, %v189
    %s191 = sld [smem:[#allocation2]]
    %v192 = vstv %s191
    %v193 = vadd.f32 %v190, %v192
    %194 = vst [vmem:[#allocation6] sm:$0x1] %v193
    // Predicated region
    $region26: #{tpu_custom_call.1} parent=1 // pred_check
      _
    $region27: #{tpu_custom_call.1} parent=1 // pred_check_branch
      %196 = sbr.rel (0) target = $region29
    $region28: #{tpu_custom_call.1} parent=1 // pred_region
      %s198 = ssub.s32 16, 16
      %199 = vsyncadd [#allocation5], %s198
      %s201 = sshll.u32 [#allocation6], 4
      %s202 = int_to_ptr.vmem [resolvable:$true] %s201
      %204 = dma.vmem_to_hbm [thread:$0]  %s202, 16, %s5, [#allocation5]
    $region29: #{tpu_custom_call.1} parent=1 // pred_fallthru
      _
    // Predicated region
    $region30: #{tpu_custom_call.1} parent=1 // pred_check
      _
    $region31: #{tpu_custom_call.1} parent=1 // pred_check_branch
      %206 = sbr.rel (0) target = $region33
    $region32: #{tpu_custom_call.1} parent=1 // pred_region
      %207 = dma.done [#allocation5], 16
    $region33: #{tpu_custom_call.1} parent=1 // pred_fallthru
      _
    %208 = vsyncpa [#allocation4], 1
    %209 = vsyncpa [#allocation5], 1

</llo_original>
